<compile_context>
chip_gen: v6e
topology: v6e:2x2x1
jax: 0.10.0
libtpu: 0.0.40
codegen_flags: <defaults>
</compile_context>

<pallas_src>
import functools
import math

import jax
import jax.numpy as jnp
from jax.experimental import pallas as pl
from jax.experimental.pallas import tpu as pltpu


def _concat_kernel(obs_ref, hid_ref, out_ref, *, n):
    # obs_ref: (TB, N); hid_ref: (TB, D*N); out_ref: (TB, (D+1)*N)
    # Two direct stores -- no in-register concatenate, no full-tile temporary.
    out_ref[:, 0:n] = obs_ref[...]
    out_ref[:, n:] = hid_ref[...]


def _round_up(x, m):
    return ((x + m - 1) // m) * m


def _plan_blocks(B, N, D, itemsize, block_rows=None):
    """Pick batch rows per grid step (TB) and an explicit scoped-VMEM limit.

    Per-row bytes are computed on lane-padded (128) widths over all three live
    operands and doubled for double-buffering; the raw-byte estimate undercounts
    real VMEM by ~7x for the module's own shapes (f32, D=8, N=32).
    """
    lane = 128
    sub = max(8, 8 * (4 // max(1, itemsize)))  # 8 (f32) / 16 (bf16) / 32 (i8)
    per_row = (_round_up(N, lane)
               + _round_up(D * N, lane)
               + _round_up((D + 1) * N, lane)) * itemsize

    if block_rows is not None:
        tb = int(block_rows)
    else:
        budget = 24 << 20                      # double-buffered tile budget
        tb = budget // (2 * per_row)
        if tb >= B or B <= sub:
            tb = B
        else:
            tb = max(sub, (tb // sub) * sub)   # keep the sublane-dim block legal

    footprint = 2 * _round_up(tb, sub) * per_row
    vmem_limit = max(32 << 20, footprint + (4 << 20))
    return int(tb), int(vmem_limit)


@functools.partial(jax.jit, static_argnames=("transpose", "block_rows"))
def concat_flattened_obs_and_stacked_hidden(flattened_obs, stacked_hidden,
                                            transpose=False, block_rows=None):
    """flattened_obs: (*, N); stacked_hidden: (*, D, N).

    Returns (*, D+1, N) if transpose is False, else (*, N, D+1).
    """
    *lead, N = flattened_obs.shape
    *lead_h, D, N_h = stacked_hidden.shape
    assert N == N_h, "last dim (N) of obs and hidden must match"
    assert tuple(lead) == tuple(lead_h), "leading dims must match"
    assert flattened_obs.dtype == stacked_hidden.dtype
    dtype = flattened_obs.dtype

    B = math.prod(lead) if lead else 1
    if B == 0:
        shape = (*lead, N, D + 1) if transpose else (*lead, D + 1, N)
        return jnp.zeros(shape, dtype=dtype)

    # Free, contiguous 2-D views (row-major reshapes -> no data movement).
    obs2d = flattened_obs.reshape(B, N)
    hid2d = stacked_hidden.reshape(B, D * N)
    W = (D + 1) * N

    itemsize = jnp.dtype(dtype).itemsize
    TB, vmem_limit = _plan_blocks(B, N, D, itemsize, block_rows)

    # No input padding / output slicing: the overhanging last batch block (when
    # B % TB != 0) is handled by Pallas (OOB reads padded, OOB writes dropped).
    grid = (pl.cdiv(B, TB),)

    out2d = pl.pallas_call(
        functools.partial(_concat_kernel, n=N),
        out_shape=jax.ShapeDtypeStruct((B, W), dtype),
        grid_spec=pl.GridSpec(
            grid=grid,
            in_specs=[
                pl.BlockSpec((TB, N), lambda b: (b, 0)),
                pl.BlockSpec((TB, D * N), lambda b: (b, 0)),
            ],
            out_specs=pl.BlockSpec((TB, W), lambda b: (b, 0)),
        ),
        compiler_params=pltpu.CompilerParams(
            dimension_semantics=("parallel",),
            vmem_limit_bytes=vmem_limit,
        ),
    )(obs2d, hid2d)

    out = out2d.reshape(*lead, D + 1, N)
    if transpose:
        # Module semantics require (*, N, D+1); for a pure-copy op this is an
        # extra HBM pass -- fuse into the consumer where possible.
        # TODO(synk): realize the transpose as a strided destination of an
        # HBM->HBM DMA variant instead of a separate XLA transpose pass.
        out = jnp.swapaxes(out, -2, -1)
    return out


if __name__ == "__main__":
    key = jax.random.PRNGKey(0)
    k_obs, k_hid = jax.random.split(key)

    # Shapes consistent with the module: batch=2, stacked depth D=8, hidden N=32.
    B, D, N = 2, 8, 32
    flattened_obs = jax.random.normal(k_obs, (B, N), dtype=jnp.float32)
    stacked_hidden = jax.random.normal(k_hid, (B, D, N), dtype=jnp.float32)

    # transpose=False path
    out = jax.block_until_ready(
        concat_flattened_obs_and_stacked_hidden(flattened_obs, stacked_hidden, transpose=False))
    ref = jnp.concatenate([flattened_obs[:, None, :], stacked_hidden], axis=-2)
    assert out.shape == (B, D + 1, N), out.shape
    assert jnp.array_equal(out, ref)

    # transpose=True path
    out_t = jax.block_until_ready(
        concat_flattened_obs_and_stacked_hidden(flattened_obs, stacked_hidden, transpose=True))
    assert out_t.shape == (B, N, D + 1), out_t.shape
    assert jnp.array_equal(out_t, jnp.swapaxes(ref, -2, -1))

    # Multiple leading dims (e.g. (batch, seq)).
    B2, T2 = 5, 3
    fo2 = jax.random.normal(k_obs, (B2, T2, N), dtype=jnp.float32)
    sh2 = jax.random.normal(k_hid, (B2, T2, D, N), dtype=jnp.float32)
    out2 = jax.block_until_ready(
        concat_flattened_obs_and_stacked_hidden(fo2, sh2, transpose=False))
    ref2 = jnp.concatenate([fo2[..., None, :], sh2], axis=-2)
    assert out2.shape == (B2, T2, D + 1, N), out2.shape
    assert jnp.array_equal(out2, ref2)

    # Non-divisible batch with a forced small block: exercises the cdiv grid with
    # an overhanging final block (no pad / no slice in the wrapper).
    B3 = 37
    fo3 = jax.random.normal(k_obs, (B3, N), dtype=jnp.float32)
    sh3 = jax.random.normal(k_hid, (B3, D, N), dtype=jnp.float32)
    out3 = jax.block_until_ready(
        concat_flattened_obs_and_stacked_hidden(fo3, sh3, transpose=False, block_rows=8))
    ref3 = jnp.concatenate([fo3[:, None, :], sh3], axis=-2)
    assert out3.shape == (B3, D + 1, N), out3.shape
    assert jnp.array_equal(out3, ref3)

    print("KERNEL_OK")
</pallas_src>

<mosaic_0001>
module attributes {stable_mosaic.version = 11 : i64} {
  func.func @_concat_kernel(%arg0: i32, %arg1: memref<2x32xf32, #tpu.memory_space<vmem>>, %arg2: memref<2x256xf32, #tpu.memory_space<vmem>>, %arg3: memref<2x288xf32, #tpu.memory_space<vmem>>) attributes {dimension_semantics = [#tpu.dimension_semantics<parallel>], iteration_bounds = array<i64: 1>, scalar_prefetch = 0 : i64, scratch_operands = 0 : i64, tpu.core_type = #tpu.core_type<tc>, window_params = [{transform_indices = @transform_0, window_bounds = array<i64: 2, 32>}, {transform_indices = @transform_1, window_bounds = array<i64: 2, 256>}, {transform_indices = @transform_2, window_bounds = array<i64: 2, 288>}]} {
    %c0 = arith.constant 0 : index
    %c0_0 = arith.constant 0 : index
    %0 = vector.load %arg1[%c0, %c0_0] : memref<2x32xf32, #tpu.memory_space<vmem>>, vector<2x32xf32>
    %c0_1 = arith.constant 0 : index
    %c0_2 = arith.constant 0 : index
    %1 = vector.load %arg3[%c0_1, %c0_2] : memref<2x288xf32, #tpu.memory_space<vmem>>, vector<2x32xf32>
    tpu.vector_store %arg3[%c0_1, %c0_2], %0 {strides = array<i32>} : memref<2x288xf32, #tpu.memory_space<vmem>>, vector<2x32xf32>,
    %c0_3 = arith.constant 0 : index
    %c0_4 = arith.constant 0 : index
    %2 = vector.load %arg2[%c0_3, %c0_4] : memref<2x256xf32, #tpu.memory_space<vmem>>, vector<2x256xf32>
    %c0_5 = arith.constant 0 : index
    %c32 = arith.constant 32 : index
    %3 = vector.load %arg3[%c0_5, %c32] : memref<2x288xf32, #tpu.memory_space<vmem>>, vector<2x256xf32>
    tpu.vector_store %arg3[%c0_5, %c32], %2 {strides = array<i32>} : memref<2x288xf32, #tpu.memory_space<vmem>>, vector<2x256xf32>,
    return
  }
  func.func @transform_0(%arg0: i32) -> (i32, i32) {
    %c0_i32 = arith.constant 0 : i32
    %c0_i32_0 = arith.constant 0 : i32
    return %arg0, %c0_i32 : i32, i32
  }
  func.func @transform_1(%arg0: i32) -> (i32, i32) {
    %c0_i32 = arith.constant 0 : i32
    %c0_i32_0 = arith.constant 0 : i32
    return %arg0, %c0_i32 : i32, i32
  }
  func.func @transform_2(%arg0: i32) -> (i32, i32) {
    %c0_i32 = arith.constant 0 : i32
    %c0_i32_0 = arith.constant 0 : i32
    return %arg0, %c0_i32 : i32, i32
  }
}

</mosaic_0001>

<llo_original>
// kernel: concat_flattened_obs_and_stacked_hidden.1
$region0: #{concat_flattened_obs_and_stacked_hidden.1}
  #allocation0 [shape = 'u32[]', space=smem, size = 0x4, offset = 0x4, fixed_abs, tag = 'smem constant byte address 0x4 - core index']
  #allocation1 [shape = 'u32[144,128]{1,0:T(1,128)}', space=vmem, size = 0x12000, scoped, tag = 'internal scratch']
  %s0 = inlined_call_operand.vmem [shape: f32[2,32], index: 0, kind: input, shape index: {}]
  %s1 = inlined_call_operand.vmem [shape: f32[2,256], index: 1, kind: input, shape index: {}]
  %s2 = inlined_call_operand.vmem [shape: f32[2,288], index: 2, kind: output, shape index: {}]
  %s3 = sld [smem:[#allocation0]]
  $region18: #{concat_flattened_obs_and_stacked_hidden.1} parent=0
    _
  %s5 = ssub.s32 1, %s3
  %s6 = scalar_select 0, %s5, %s3
  // Predicated region
  $region2: #{concat_flattened_obs_and_stacked_hidden.1} parent=0 // pred_check
    _
  $region3: #{concat_flattened_obs_and_stacked_hidden.1} parent=0 // pred_check_branch
    %8 = sbr.rel (0) target = $region5
  $region4: #{concat_flattened_obs_and_stacked_hidden.1} parent=0 // pred_region
    _
  $region5: #{concat_flattened_obs_and_stacked_hidden.1} parent=0 // pred_fallthru
    _
  // Predicated region
  $region6: #{concat_flattened_obs_and_stacked_hidden.1} parent=0 // pred_check
    _
  $region7: #{concat_flattened_obs_and_stacked_hidden.1} parent=0 // pred_check_branch
    %10 = sbr.rel (0) target = $region9
  $region8: #{concat_flattened_obs_and_stacked_hidden.1} parent=0 // pred_region
    _
  $region9: #{concat_flattened_obs_and_stacked_hidden.1} parent=0 // pred_fallthru
    _
  %v11 = vld [vmem:[%s0] sm:$0x3]
  %vm12 = vcmask 254976
  %13 = vst.msk [vmem:[%s2] sm:$0x3] %vm12, %v11
  %v14 = vld [vmem:[%s1] sm:$0xf]
  %16 = vrot.lane.b32.xlu0 %v14, 32
  %v17 = vpop.permute.xlu0 %16
  %v18 = vrot.slane %v17, 6
  %vm19 = vcmask 261120
  %v20 = vsel %vm19, %v18, %v17
  %vm22 = vcmask 1041664
  %vm23 = vcmask 1043458
  %vm24 = vmor %vm23, %vm22
  %vm25 = vcmask 259076
  %vm26 = vmor %vm25, %vm24
  %27 = vst.msk [vmem:[%s2] sm:$0x3f] %vm26, %v20
  // Predicated region
  $region10: #{concat_flattened_obs_and_stacked_hidden.1} parent=0 // pred_check
    _
  $region11: #{concat_flattened_obs_and_stacked_hidden.1} parent=0 // pred_check_branch
    %29 = sbr.rel (0) target = $region13
  $region12: #{concat_flattened_obs_and_stacked_hidden.1} parent=0 // pred_region
    _
  $region13: #{concat_flattened_obs_and_stacked_hidden.1} parent=0 // pred_fallthru
    _
  // Predicated region
  $region14: #{concat_flattened_obs_and_stacked_hidden.1} parent=0 // pred_check
    _
  $region15: #{concat_flattened_obs_and_stacked_hidden.1} parent=0 // pred_check_branch
    %31 = sbr.rel (0) target = $region17
  $region16: #{concat_flattened_obs_and_stacked_hidden.1} parent=0 // pred_region
    _
  $region17: #{concat_flattened_obs_and_stacked_hidden.1} parent=0 // pred_fallthru
    _

</llo_original>
